<compile_context>
chip_gen: v7x
topology: tpu7x:2x2x1
jax: 0.10.0
libtpu: 0.0.40
codegen_flags: <defaults>
</compile_context>

<pallas_src>
import functools

import jax
import jax.numpy as jnp
from jax.experimental import pallas as pl
from jax.experimental.pallas import tpu as pltpu


def _round_up(x: int, m: int) -> int:
    return (x + m - 1) // m * m


def adapter_kernel(x_ref, w1_ref, b1_ref, w2_ref, b2_ref, g_ref, beta_ref, o_ref,
                   *, d_true: int, d_pad: int):
    # x_ref: (tm, Dp) tile of flattened (zero-padded) input rows, native dtype.
    x = x_ref[...]

    # --- frame_lid.ctc_lid : Linear(D -> L) + ReLU ---------------------------
    # Native-dtype operands into the MXU, f32 accumulation.
    logits = jnp.dot(x, w1_ref[...], preferred_element_type=jnp.float32)
    logits = jnp.maximum(logits + b1_ref[...], 0.0)        # (tm, Lp), f32
    # Padded logit columns are relu(0 + 0) = 0 exactly.

    # --- up_linear : Linear(L -> D) ------------------------------------------
    up = jnp.dot(logits.astype(w2_ref.dtype), w2_ref[...],
                 preferred_element_type=jnp.float32)
    up = up + b2_ref[...]                                   # (tm, Dp), f32
    # Padded columns of `up` are exactly 0 (zero W_up cols, zero b_up pad).

    # --- LayerNorm over the TRUE last dim D (eps=1e-5, affine) ---------------
    inv_d = 1.0 / d_true
    mean = jnp.sum(up, axis=-1, keepdims=True) * inv_d      # pad cols add 0
    centered = up - mean
    sq = jnp.sum(centered * centered, axis=-1, keepdims=True)
    # Each padded column contributed (0 - mean)^2 = mean^2; remove it.
    var = (sq - float(d_pad - d_true) * mean * mean) * inv_d
    normed = centered * jax.lax.rsqrt(var + 1e-5)
    normed = normed * g_ref[...] + beta_ref[...]            # pad cols -> 0

    # --- residual add ---------------------------------------------------------
    o_ref[...] = (x.astype(jnp.float32) + normed).astype(o_ref.dtype)


def lid_prompt_adapter(xs, w_lid, b_lid, w_up, b_up, gamma, beta, *, tm=256):
    """xs: (B, T, D); w_lid: (D, L); w_up: (L, D); biases / affine: (1, L) / (1, D)."""
    B, T, D = xs.shape
    L = w_lid.shape[1]
    M = B * T

    # Lane-dense padded dims.
    Dp = _round_up(D, 128)
    Lp = _round_up(L, 128)

    # Row tile: big lane-dense slabs, but never larger than the (8-aligned)
    # row count; rows are zero-padded so ragged B*T works.
    tm = max(8, min(tm, _round_up(M, 8)))
    Mp = _round_up(M, tm)

    cdt = xs.dtype  # matmul operand dtype (bf16 stays bf16 into the MXU)

    x2 = jnp.pad(xs.reshape(M, D), ((0, Mp - M), (0, Dp - D)))

    w1 = jnp.pad(w_lid, ((0, Dp - D), (0, Lp - L))).astype(cdt)
    b1 = jnp.pad(b_lid.reshape(1, L), ((0, 0), (0, Lp - L))).astype(jnp.float32)
    w2 = jnp.pad(w_up, ((0, Lp - L), (0, Dp - D))).astype(cdt)
    b2 = jnp.pad(b_up.reshape(1, D), ((0, 0), (0, Dp - D))).astype(jnp.float32)
    g = jnp.pad(gamma.reshape(1, D), ((0, 0), (0, Dp - D))).astype(jnp.float32)
    bt = jnp.pad(beta.reshape(1, D), ((0, 0), (0, Dp - D))).astype(jnp.float32)

    # Explicit VMEM budget: double-buffered x/out tiles + resident weights +
    # f32 temporaries; capped at 64 MiB so the same config fits v7x.
    itemsize = jnp.dtype(cdt).itemsize
    vmem_est = (2 * tm * Dp * itemsize            # x tiles (double-buffered)
                + 2 * tm * Dp * itemsize          # out tiles
                + 2 * 2 * Dp * Lp * itemsize      # W_lid + W_up
                + 2 * 4 * Dp * 4                  # biases / gamma / beta
                + 2 * tm * (Dp + Lp) * 4)         # f32 logits / up temporaries
    vmem_limit = int(min(64 << 20, max(2 * vmem_est, 32 << 20)))

    kernel = functools.partial(adapter_kernel, d_true=D, d_pad=Dp)

    out2 = pl.pallas_call(
        kernel,
        out_shape=jax.ShapeDtypeStruct((Mp, Dp), xs.dtype),
        grid_spec=pltpu.PrefetchScalarGridSpec(
            num_scalar_prefetch=0,
            grid=(Mp // tm,),
            in_specs=[
                pl.BlockSpec((tm, Dp), lambda i: (i, 0)),   # x tile
                pl.BlockSpec((Dp, Lp), lambda i: (0, 0)),   # W_lid (in, out), padded
                pl.BlockSpec((1, Lp), lambda i: (0, 0)),    # b_lid
                pl.BlockSpec((Lp, Dp), lambda i: (0, 0)),   # W_up  (in, out), padded
                pl.BlockSpec((1, Dp), lambda i: (0, 0)),    # b_up
                pl.BlockSpec((1, Dp), lambda i: (0, 0)),    # layernorm gamma
                pl.BlockSpec((1, Dp), lambda i: (0, 0)),    # layernorm beta
            ],
            out_specs=pl.BlockSpec((tm, Dp), lambda i: (i, 0)),
        ),
        compiler_params=pltpu.CompilerParams(
            dimension_semantics=("parallel",),
            vmem_limit_bytes=vmem_limit),
    )(x2, w1, b1, w2, b2, g, bt)

    return out2[:M, :D].reshape(B, T, D)


def reference(xs, w_lid, b_lid, w_up, b_up, gamma, beta):
    logits = jnp.maximum(xs @ w_lid + b_lid[0], 0.0)
    up = logits @ w_up + b_up[0]
    mean = jnp.mean(up, axis=-1, keepdims=True)
    var = jnp.mean((up - mean) ** 2, axis=-1, keepdims=True)
    normed = (up - mean) * jax.lax.rsqrt(var + 1e-5) * gamma[0] + beta[0]
    return xs + normed


if __name__ == "__main__":
    # Small shapes consistent with the module:
    #   B=2 utterances, T=8 frames, encoder_output_size D=32, lid_class L=4.
    B, T, D, L = 2, 8, 32, 4

    key = jax.random.PRNGKey(0)
    k_x, k_w1, k_b1, k_w2, k_b2 = jax.random.split(key, 5)

    xs = jax.random.normal(k_x, (B, T, D), dtype=jnp.float32)

    # PyTorch Linear weights are (out, in); stored pre-transposed as (in, out)
    # since this is a synthetic init.
    w_lid = jax.random.normal(k_w1, (D, L), dtype=jnp.float32) * 0.1
    b_lid = jax.random.normal(k_b1, (1, L), dtype=jnp.float32) * 0.1
    w_up = jax.random.normal(k_w2, (L, D), dtype=jnp.float32) * 0.1
    b_up = jax.random.normal(k_b2, (1, D), dtype=jnp.float32) * 0.1
    gamma = jnp.ones((1, D), dtype=jnp.float32)   # nn.LayerNorm default weight
    beta = jnp.zeros((1, D), dtype=jnp.float32)   # nn.LayerNorm default bias

    out = lid_prompt_adapter(xs, w_lid, b_lid, w_up, b_up, gamma, beta)
    out = jax.block_until_ready(out)

    ref = reference(xs, w_lid, b_lid, w_up, b_up, gamma, beta)
    assert out.shape == (B, T, D)
    assert jnp.allclose(out, ref, atol=1e-4, rtol=1e-4), "mismatch vs JAX reference"

    print("KERNEL_OK")
</pallas_src>

<mosaic_0001>
module attributes {stable_mosaic.version = 11 : i64} {
  func.func @adapter_kernel(%arg0: i32, %arg1: memref<16x128xf32, #tpu.memory_space<vmem>>, %arg2: memref<128x128xf32, #tpu.memory_space<vmem>>, %arg3: memref<1x128xf32, #tpu.memory_space<vmem>>, %arg4: memref<128x128xf32, #tpu.memory_space<vmem>>, %arg5: memref<1x128xf32, #tpu.memory_space<vmem>>, %arg6: memref<1x128xf32, #tpu.memory_space<vmem>>, %arg7: memref<1x128xf32, #tpu.memory_space<vmem>>, %arg8: memref<16x128xf32, #tpu.memory_space<vmem>>) attributes {dimension_semantics = [#tpu.dimension_semantics<parallel>], iteration_bounds = array<i64: 1>, scalar_prefetch = 0 : i64, scratch_operands = 0 : i64, tpu.core_type = #tpu.core_type<tc>, window_params = [{transform_indices = @transform_0, window_bounds = array<i64: 16, 128>}, {pipeline_mode = #tpu.pipeline_mode<synchronous>, transform_indices = @transform_1, window_bounds = array<i64: 128, 128>}, {pipeline_mode = #tpu.pipeline_mode<synchronous>, transform_indices = @transform_2, window_bounds = array<i64: 1, 128>}, {pipeline_mode = #tpu.pipeline_mode<synchronous>, transform_indices = @transform_3, window_bounds = array<i64: 128, 128>}, {pipeline_mode = #tpu.pipeline_mode<synchronous>, transform_indices = @transform_4, window_bounds = array<i64: 1, 128>}, {pipeline_mode = #tpu.pipeline_mode<synchronous>, transform_indices = @transform_5, window_bounds = array<i64: 1, 128>}, {pipeline_mode = #tpu.pipeline_mode<synchronous>, transform_indices = @transform_6, window_bounds = array<i64: 1, 128>}, {transform_indices = @transform_7, window_bounds = array<i64: 16, 128>}]} {
    %c0 = arith.constant 0 : index
    %c0_0 = arith.constant 0 : index
    %0 = vector.load %arg1[%c0, %c0_0] : memref<16x128xf32, #tpu.memory_space<vmem>>, vector<16x128xf32>
    %c0_1 = arith.constant 0 : index
    %c0_2 = arith.constant 0 : index
    %1 = vector.load %arg2[%c0_1, %c0_2] : memref<128x128xf32, #tpu.memory_space<vmem>>, vector<128x128xf32>
    %cst = arith.constant dense<0.000000e+00> : vector<16x128xf32>
    %2 = tpu.matmul %0, %1, %cst {dimension_numbers = #tpu.dot_dimension_numbers<[1], [0], [0], [1], [0, 0, 1, 1], [], []>} : vector<16x128xf32>, vector<128x128xf32>, vector<16x128xf32> -> vector<16x128xf32>
    %c0_3 = arith.constant 0 : index
    %c0_4 = arith.constant 0 : index
    %3 = vector.load %arg3[%c0_3, %c0_4] : memref<1x128xf32, #tpu.memory_space<vmem>>, vector<1x128xf32>
    %4 = vector.broadcast %3 : vector<1x128xf32> to vector<16x128xf32>
    %5 = arith.addf %2, %4 : vector<16x128xf32>
    %cst_5 = arith.constant 0.000000e+00 : f32
    %6 = vector.broadcast %cst_5 : f32 to vector<16x128xf32>
    %7 = arith.maximumf %5, %6 : vector<16x128xf32>
    %c0_6 = arith.constant 0 : index
    %c0_7 = arith.constant 0 : index
    %8 = vector.load %arg4[%c0_6, %c0_7] : memref<128x128xf32, #tpu.memory_space<vmem>>, vector<128x128xf32>
    %cst_8 = arith.constant dense<0.000000e+00> : vector<16x128xf32>
    %9 = tpu.matmul %7, %8, %cst_8 {dimension_numbers = #tpu.dot_dimension_numbers<[1], [0], [0], [1], [0, 0, 1, 1], [], []>} : vector<16x128xf32>, vector<128x128xf32>, vector<16x128xf32> -> vector<16x128xf32>
    %c0_9 = arith.constant 0 : index
    %c0_10 = arith.constant 0 : index
    %10 = vector.load %arg5[%c0_9, %c0_10] : memref<1x128xf32, #tpu.memory_space<vmem>>, vector<1x128xf32>
    %11 = vector.broadcast %10 : vector<1x128xf32> to vector<16x128xf32>
    %12 = arith.addf %9, %11 : vector<16x128xf32>
    %cst_11 = arith.constant dense<0.000000e+00> : vector<16xf32>
    %13 = vector.multi_reduction <add>, %12, %cst_11 [1] : vector<16x128xf32> to vector<16xf32>
    %14 = vector.shape_cast %13 : vector<16xf32> to vector<16x1xf32>
    %cst_12 = arith.constant 3.125000e-02 : f32
    %15 = vector.broadcast %cst_12 : f32 to vector<16x1xf32>
    %16 = arith.mulf %14, %15 : vector<16x1xf32>
    %17 = vector.broadcast %16 : vector<16x1xf32> to vector<16x128xf32>
    %18 = arith.subf %12, %17 : vector<16x128xf32>
    %19 = arith.mulf %18, %18 : vector<16x128xf32>
    %cst_13 = arith.constant dense<0.000000e+00> : vector<16xf32>
    %20 = vector.multi_reduction <add>, %19, %cst_13 [1] : vector<16x128xf32> to vector<16xf32>
    %21 = vector.shape_cast %20 : vector<16xf32> to vector<16x1xf32>
    %cst_14 = arith.constant 9.600000e+01 : f32
    %22 = vector.broadcast %cst_14 : f32 to vector<16x1xf32>
    %23 = arith.mulf %22, %16 : vector<16x1xf32>
    %24 = arith.mulf %23, %16 : vector<16x1xf32>
    %25 = arith.subf %21, %24 : vector<16x1xf32>
    %cst_15 = arith.constant 3.125000e-02 : f32
    %26 = vector.broadcast %cst_15 : f32 to vector<16x1xf32>
    %27 = arith.mulf %25, %26 : vector<16x1xf32>
    %cst_16 = arith.constant 9.99999974E-6 : f32
    %28 = vector.broadcast %cst_16 : f32 to vector<16x1xf32>
    %29 = arith.addf %27, %28 : vector<16x1xf32>
    %30 = math.rsqrt %29 : vector<16x1xf32>
    %31 = vector.broadcast %30 : vector<16x1xf32> to vector<16x128xf32>
    %32 = arith.mulf %18, %31 : vector<16x128xf32>
    %c0_17 = arith.constant 0 : index
    %c0_18 = arith.constant 0 : index
    %33 = vector.load %arg6[%c0_17, %c0_18] : memref<1x128xf32, #tpu.memory_space<vmem>>, vector<1x128xf32>
    %34 = vector.broadcast %33 : vector<1x128xf32> to vector<16x128xf32>
    %35 = arith.mulf %32, %34 : vector<16x128xf32>
    %c0_19 = arith.constant 0 : index
    %c0_20 = arith.constant 0 : index
    %36 = vector.load %arg7[%c0_19, %c0_20] : memref<1x128xf32, #tpu.memory_space<vmem>>, vector<1x128xf32>
    %37 = vector.broadcast %36 : vector<1x128xf32> to vector<16x128xf32>
    %38 = arith.addf %35, %37 : vector<16x128xf32>
    %39 = arith.addf %0, %38 : vector<16x128xf32>
    %c0_21 = arith.constant 0 : index
    %c0_22 = arith.constant 0 : index
    %40 = vector.load %arg8[%c0_21, %c0_22] : memref<16x128xf32, #tpu.memory_space<vmem>>, vector<16x128xf32>
    tpu.vector_store %arg8[%c0_21, %c0_22], %39 {strides = array<i32>} : memref<16x128xf32, #tpu.memory_space<vmem>>, vector<16x128xf32>,
    return
  }
  func.func @transform_0(%arg0: i32) -> (i32, i32) {
    %c0_i32 = arith.constant 0 : i32
    %c0_i32_0 = arith.constant 0 : i32
    return %arg0, %c0_i32 : i32, i32
  }
  func.func @transform_1(%arg0: i32) -> (i32, i32) {
    %c0_i32 = arith.constant 0 : i32
    %c0_i32_0 = arith.constant 0 : i32
    %c0_i32_1 = arith.constant 0 : i32
    return %c0_i32, %c0_i32_0 : i32, i32
  }
  func.func @transform_2(%arg0: i32) -> (i32, i32) {
    %c0_i32 = arith.constant 0 : i32
    %c0_i32_0 = arith.constant 0 : i32
    %c0_i32_1 = arith.constant 0 : i32
    return %c0_i32, %c0_i32_0 : i32, i32
  }
  func.func @transform_3(%arg0: i32) -> (i32, i32) {
    %c0_i32 = arith.constant 0 : i32
    %c0_i32_0 = arith.constant 0 : i32
    %c0_i32_1 = arith.constant 0 : i32
    return %c0_i32, %c0_i32_0 : i32, i32
  }
  func.func @transform_4(%arg0: i32) -> (i32, i32) {
    %c0_i32 = arith.constant 0 : i32
    %c0_i32_0 = arith.constant 0 : i32
    %c0_i32_1 = arith.constant 0 : i32
    return %c0_i32, %c0_i32_0 : i32, i32
  }
  func.func @transform_5(%arg0: i32) -> (i32, i32) {
    %c0_i32 = arith.constant 0 : i32
    %c0_i32_0 = arith.constant 0 : i32
    %c0_i32_1 = arith.constant 0 : i32
    return %c0_i32, %c0_i32_0 : i32, i32
  }
  func.func @transform_6(%arg0: i32) -> (i32, i32) {
    %c0_i32 = arith.constant 0 : i32
    %c0_i32_0 = arith.constant 0 : i32
    %c0_i32_1 = arith.constant 0 : i32
    return %c0_i32, %c0_i32_0 : i32, i32
  }
  func.func @transform_7(%arg0: i32) -> (i32, i32) {
    %c0_i32 = arith.constant 0 : i32
    %c0_i32_0 = arith.constant 0 : i32
    return %arg0, %c0_i32 : i32, i32
  }
}

</mosaic_0001>

<llo_original>
// kernel: tpu_custom_call.1
$region0: #{tpu_custom_call.1}
  #allocation0 [shape = 'u32[]', space=smem, size = 0x4, offset = 0x4, fixed_abs, tag = 'smem constant byte address 0x4 - core index']
  #allocation1 [shape = 'u32[144,128]{1,0:T(1,128)}', space=vmem, size = 0x12000, scoped, tag = 'internal scratch']
  %s0 = inlined_call_operand.hbm [shape: f32[16,128], index: 0, kind: input, shape index: {}]
  %s1 = inlined_call_operand.hbm [shape: f32[128,128], index: 1, kind: input, shape index: {}]
  %s2 = inlined_call_operand.vmem [shape: f32[1,128], index: 2, kind: input, shape index: {}]
  %s3 = inlined_call_operand.hbm [shape: f32[128,128], index: 3, kind: input, shape index: {}]
  %s4 = inlined_call_operand.vmem [shape: f32[1,128], index: 4, kind: input, shape index: {}]
  %s5 = inlined_call_operand.vmem [shape: f32[1,128], index: 5, kind: input, shape index: {}]
  %s6 = inlined_call_operand.vmem [shape: f32[1,128], index: 6, kind: input, shape index: {}]
  %s7 = inlined_call_operand.hbm [shape: f32[16,128], index: 7, kind: output, shape index: {}]
  %s8 = sld [smem:[#allocation0]]
  $region50: #{tpu_custom_call.1} parent=0
    _
  %s10 = ssub.s32 1, %s8
  %s11 = scalar_select 0, %s10, %s8
  $region1: #{tpu_custom_call.1} parent=0
    #allocation2 [shape = 'u8[8192]{0}', space=vmem, size = 0x2000, scoped, tag = 'input window, operand 0, single buffered']
    #allocation3 [shape = 's32[1]{0}', space=sflag, size = 0x4, scoped, tag = 'scoped memory for tpu_custom_call.1']
    #allocation4 [shape = 's32[1]{0}', space=sflag, size = 0x4, scoped, tag = 'scoped memory for tpu_custom_call.1']
    #allocation5 [shape = 'u8[65536]{0}', space=vmem, size = 0x10000, scoped, tag = 'input window, operand 1, single buffered']
    #allocation6 [shape = 's32[1]{0}', space=sflag, size = 0x4, scoped, tag = 'scoped memory for tpu_custom_call.1']
    #allocation7 [shape = 'u8[65536]{0}', space=vmem, size = 0x10000, scoped, tag = 'input window, operand 3, single buffered']
    #allocation8 [shape = 'u8[8192]{0}', space=vmem, size = 0x2000, scoped, tag = 'output window, operand 0, single buffered']
    %12 = vsyncpa [#allocation3], 0
    %13 = vsyncpa [#allocation6], 0
    %14 = vsyncpa [#allocation4], 0
    // Predicated region
    $region2: #{tpu_custom_call.1} parent=1 // pred_check
      _
    $region3: #{tpu_custom_call.1} parent=1 // pred_check_branch
      %16 = sbr.rel (0) target = $region5
    $region4: #{tpu_custom_call.1} parent=1 // pred_region
      %s18 = ssub.s32 256, 256
      %19 = vsyncadd [#allocation3], %s18
      %s20 = sshll.u32 [#allocation2], 4
      %s21 = int_to_ptr.vmem [resolvable:$true] %s20
      %26 = dma.hbm_to_vmem [thread:$0]  %s0, 256, %s21, [#allocation3], 128, 128, 8
    $region5: #{tpu_custom_call.1} parent=1 // pred_fallthru
      _
    // Predicated region
    $region6: #{tpu_custom_call.1} parent=1 // pred_check
      _
    $region7: #{tpu_custom_call.1} parent=1 // pred_check_branch
      %28 = sbr.rel (0) target = $region9
    $region8: #{tpu_custom_call.1} parent=1 // pred_region
      %s30 = ssub.s32 2048, 2048
      %31 = vsyncadd [#allocation6], %s30
      %s32 = sshll.u32 [#allocation5], 4
      %s33 = int_to_ptr.vmem [resolvable:$true] %s32
      %38 = dma.hbm_to_vmem [thread:$0]  %s1, 2048, %s33, [#allocation6], 128, 128, 8
    $region9: #{tpu_custom_call.1} parent=1 // pred_fallthru
      _
    // Predicated region
    $region10: #{tpu_custom_call.1} parent=1 // pred_check
      _
    $region11: #{tpu_custom_call.1} parent=1 // pred_check_branch
      %40 = sbr.rel (0) target = $region13
    $region12: #{tpu_custom_call.1} parent=1 // pred_region
      _
    $region13: #{tpu_custom_call.1} parent=1 // pred_fallthru
      _
    // Predicated region
    $region14: #{tpu_custom_call.1} parent=1 // pred_check
      _
    $region15: #{tpu_custom_call.1} parent=1 // pred_check_branch
      %42 = sbr.rel (0) target = $region17
    $region16: #{tpu_custom_call.1} parent=1 // pred_region
      %s44 = ssub.s32 2048, 2048
      %45 = vsyncadd [#allocation6], %s44
      %s46 = sshll.u32 [#allocation7], 4
      %s47 = int_to_ptr.vmem [resolvable:$true] %s46
      %52 = dma.hbm_to_vmem [thread:$0]  %s3, 2048, %s47, [#allocation6], 128, 128, 8
    $region17: #{tpu_custom_call.1} parent=1 // pred_fallthru
      _
    // Predicated region
    $region18: #{tpu_custom_call.1} parent=1 // pred_check
      _
    $region19: #{tpu_custom_call.1} parent=1 // pred_check_branch
      %54 = sbr.rel (0) target = $region21
    $region20: #{tpu_custom_call.1} parent=1 // pred_region
      _
    $region21: #{tpu_custom_call.1} parent=1 // pred_fallthru
      _
    // Predicated region
    $region22: #{tpu_custom_call.1} parent=1 // pred_check
      _
    $region23: #{tpu_custom_call.1} parent=1 // pred_check_branch
      %56 = sbr.rel (0) target = $region25
    $region24: #{tpu_custom_call.1} parent=1 // pred_region
      _
    $region25: #{tpu_custom_call.1} parent=1 // pred_fallthru
      _
    // Predicated region
    $region26: #{tpu_custom_call.1} parent=1 // pred_check
      _
    $region27: #{tpu_custom_call.1} parent=1 // pred_check_branch
      %58 = sbr.rel (0) target = $region29
    $region28: #{tpu_custom_call.1} parent=1 // pred_region
      _
    $region29: #{tpu_custom_call.1} parent=1 // pred_fallthru
      _
    // Predicated region
    $region30: #{tpu_custom_call.1} parent=1 // pred_check
      _
    $region31: #{tpu_custom_call.1} parent=1 // pred_check_branch
      %60 = sbr.rel (0) target = $region33
    $region32: #{tpu_custom_call.1} parent=1 // pred_region
      %61 = dma.done [#allocation3], 256
    $region33: #{tpu_custom_call.1} parent=1 // pred_fallthru
      _
    // Predicated region
    $region34: #{tpu_custom_call.1} parent=1 // pred_check
      _
    $region35: #{tpu_custom_call.1} parent=1 // pred_check_branch
      %63 = sbr.rel (0) target = $region37
    $region36: #{tpu_custom_call.1} parent=1 // pred_region
      %64 = dma.done [#allocation6], 2048
    $region37: #{tpu_custom_call.1} parent=1 // pred_fallthru
      _
    // Predicated region
    $region38: #{tpu_custom_call.1} parent=1 // pred_check
      _
    $region39: #{tpu_custom_call.1} parent=1 // pred_check_branch
      %66 = sbr.rel (0) target = $region41
    $region40: #{tpu_custom_call.1} parent=1 // pred_region
      %67 = dma.done [#allocation6], 2048
    $region41: #{tpu_custom_call.1} parent=1 // pred_fallthru
      _
    %v68 = vld [vmem:[#allocation2] sm:$0xff]
    %v69 = vld [vmem:[#allocation2 + $0x8] sm:$0xff]
    %v70 = vld [vmem:[#allocation5] sm:$0xff]
    %v71 = vld [vmem:[#allocation5 + $0x8] sm:$0xff]
    %v72 = vld [vmem:[#allocation5 + $0x10] sm:$0xff]
    %v73 = vld [vmem:[#allocation5 + $0x18] sm:$0xff]
    %v74 = vld [vmem:[#allocation5 + $0x20] sm:$0xff]
    %v75 = vld [vmem:[#allocation5 + $0x28] sm:$0xff]
    %v76 = vld [vmem:[#allocation5 + $0x30] sm:$0xff]
    %v77 = vld [vmem:[#allocation5 + $0x38] sm:$0xff]
    %v78 = vld [vmem:[#allocation5 + $0x40] sm:$0xff]
    %v79 = vld [vmem:[#allocation5 + $0x48] sm:$0xff]
    %v80 = vld [vmem:[#allocation5 + $0x50] sm:$0xff]
    %v81 = vld [vmem:[#allocation5 + $0x58] sm:$0xff]
    %v82 = vld [vmem:[#allocation5 + $0x60] sm:$0xff]
    %v83 = vld [vmem:[#allocation5 + $0x68] sm:$0xff]
    %v84 = vld [vmem:[#allocation5 + $0x70] sm:$0xff]
    %v85 = vld [vmem:[#allocation5 + $0x78] sm:$0xff]
    %v86 = vld [vmem:[%s2] sm:$0x1]
    %v88 = vlaneseq
    %v89 = vshrl.u32 %v88, 7
    %v90 = vsub.s32 0, %v89
    %v91 = vrot.slane %v86, %v90
    %93 = vmatprep.subr.mxu0 0.0
    %94 = vmatpush1.msra.mxu0 %v70
    %95 = vmatprep.subr.mxu0 0.0
    %96 = vmatpush1.msra.mxu0 %v71
    %97 = vmatprep.subr.mxu0 0.0
    %98 = vmatpush1.msra.mxu0 %v72
    %99 = vmatprep.subr.mxu0 0.0
    %100 = vmatpush1.msra.mxu0 %v73
    %101 = vmatprep.subr.mxu0 0.0
    %102 = vmatpush1.msra.mxu0 %v74
    %103 = vmatprep.subr.mxu0 0.0
    %104 = vmatpush1.msra.mxu0 %v75
    %105 = vmatprep.subr.mxu0 0.0
    %106 = vmatpush1.msra.mxu0 %v76
    %107 = vmatprep.subr.mxu0 0.0
    %108 = vmatpush1.msra.mxu0 %v77
    %109 = vmatprep.subr.mxu0 0.0
    %110 = vmatpush1.msra.mxu0 %v78
    %111 = vmatprep.subr.mxu0 0.0
    %112 = vmatpush1.msra.mxu0 %v79
    %113 = vmatprep.subr.mxu0 0.0
    %114 = vmatpush1.msra.mxu0 %v80
    %115 = vmatprep.subr.mxu0 0.0
    %116 = vmatpush1.msra.mxu0 %v81
    %117 = vmatprep.subr.mxu0 0.0
    %118 = vmatpush1.msra.mxu0 %v82
    %119 = vmatprep.subr.mxu0 0.0
    %120 = vmatpush1.msra.mxu0 %v83
    %121 = vmatprep.subr.mxu0 0.0
    %122 = vmatpush1.msra.mxu0 %v84
    %123 = vmatprep.subr.mxu0 0.0
    %124 = vmatpush1.msra.mxu0 %v85
    %125 = vmatprep.subr.mxu0 0.0
    %126 = vmatpush1.msra.mxu0 0.0
    %127 = vmatprep.subr.mxu0 0.0
    %128 = vmatpush1.msra.mxu0 0.0
    %129 = vmatprep.subr.mxu0 0.0
    %130 = vmatpush1.msra.mxu0 0.0
    %131 = vmatprep.subr.mxu0 0.0
    %132 = vmatpush1.msra.mxu0 0.0
    %133 = vmatprep.subr.mxu0 0.0
    %134 = vmatpush1.msra.mxu0 0.0
    %135 = vmatprep.subr.mxu0 0.0
    %136 = vmatpush1.msra.mxu0 0.0
    %137 = vmatprep.subr.mxu0 0.0
    %138 = vmatpush1.msra.mxu0 0.0
    %139 = vmatprep.subr.mxu0 0.0
    %140 = vmatpush1.msra.mxu0 0.0
    %141 = vmatprep.subr.mxu0 0.0
    %142 = vmatpush1.msra.mxu0 0.0
    %143 = vmatprep.subr.mxu0 0.0
    %144 = vmatpush1.msra.mxu0 0.0
    %145 = vmatprep.subr.mxu0 0.0
    %146 = vmatpush1.msra.mxu0 0.0
    %147 = vmatprep.subr.mxu0 0.0
    %148 = vmatpush1.msra.mxu0 0.0
    %149 = vmatprep.subr.mxu0 0.0
    %150 = vmatpush1.msra.mxu0 0.0
    %151 = vmatprep.subr.mxu0 0.0
    %152 = vmatpush1.msra.mxu0 0.0
    %153 = vmatprep.subr.mxu0 0.0
    %154 = vmatpush1.msra.mxu0 0.0
    %155 = vmatprep.subr.mxu0 0.0
    %156 = vmatpush1.msra.mxu0 0.0
    %157 = vmatprep.mubr.f32.mxu0 0.0
    %158 = vmatmul.mubr.f32.gmra.mrb[0].mxu0 %v68
    %v159 = vpop.f32.mrb[0].mxu0
    %v160 = vadd.f32 %v91, %v159
    %v161 = vpop.f32.mrb[0].mxu0
    %162 = vmatprep.mubr.f32.mxu0 0.0
    %163 = vmatmul.mubr.f32.gmra.mrb[0].mxu0 %v69
    %v164 = vpop.f32.mrb[0].mxu0
    %v165 = vadd.f32 %v91, %v164
    %v166 = vpop.f32.mrb[0].mxu0
    %167 = vdwg.mxu0
    %v168 = vmax.f32 %v160, 0.0
    %v169 = vmax.f32 %v165, 0.0
    %v170 = vld [vmem:[#allocation7] sm:$0xff]
    %v171 = vld [vmem:[#allocation7 + $0x8] sm:$0xff]
    %v172 = vld [vmem:[#allocation7 + $0x10] sm:$0xff]
    %v173 = vld [vmem:[#allocation7 + $0x18] sm:$0xff]
    %v174 = vld [vmem:[#allocation7 + $0x20] sm:$0xff]
    %v175 = vld [vmem:[#allocation7 + $0x28] sm:$0xff]
    %v176 = vld [vmem:[#allocation7 + $0x30] sm:$0xff]
    %v177 = vld [vmem:[#allocation7 + $0x38] sm:$0xff]
    %v178 = vld [vmem:[#allocation7 + $0x40] sm:$0xff]
    %v179 = vld [vmem:[#allocation7 + $0x48] sm:$0xff]
    %v180 = vld [vmem:[#allocation7 + $0x50] sm:$0xff]
    %v181 = vld [vmem:[#allocation7 + $0x58] sm:$0xff]
    %v182 = vld [vmem:[#allocation7 + $0x60] sm:$0xff]
    %v183 = vld [vmem:[#allocation7 + $0x68] sm:$0xff]
    %v184 = vld [vmem:[#allocation7 + $0x70] sm:$0xff]
    %v185 = vld [vmem:[#allocation7 + $0x78] sm:$0xff]
    %v186 = vld [vmem:[%s4] sm:$0x1]
    %v188 = vlaneseq
    %v189 = vshrl.u32 %v188, 7
    %v190 = vsub.s32 0, %v189
    %v191 = vrot.slane %v186, %v190
    %193 = vmatprep.subr.mxu0 0.0
    %194 = vmatpush1.msra.mxu0 %v170
    %195 = vmatprep.subr.mxu0 0.0
    %196 = vmatpush1.msra.mxu0 %v171
    %197 = vmatprep.subr.mxu0 0.0
    %198 = vmatpush1.msra.mxu0 %v172
    %199 = vmatprep.subr.mxu0 0.0
    %200 = vmatpush1.msra.mxu0 %v173
    %201 = vmatprep.subr.mxu0 0.0
    %202 = vmatpush1.msra.mxu0 %v174
    %203 = vmatprep.subr.mxu0 0.0
    %204 = vmatpush1.msra.mxu0 %v175
    %205 = vmatprep.subr.mxu0 0.0
    %206 = vmatpush1.msra.mxu0 %v176
    %207 = vmatprep.subr.mxu0 0.0
    %208 = vmatpush1.msra.mxu0 %v177
    %209 = vmatprep.subr.mxu0 0.0
    %210 = vmatpush1.msra.mxu0 %v178
    %211 = vmatprep.subr.mxu0 0.0
    %212 = vmatpush1.msra.mxu0 %v179
    %213 = vmatprep.subr.mxu0 0.0
    %214 = vmatpush1.msra.mxu0 %v180
    %215 = vmatprep.subr.mxu0 0.0
    %216 = vmatpush1.msra.mxu0 %v181
    %217 = vmatprep.subr.mxu0 0.0
    %218 = vmatpush1.msra.mxu0 %v182
    %219 = vmatprep.subr.mxu0 0.0
    %220 = vmatpush1.msra.mxu0 %v183
    %221 = vmatprep.subr.mxu0 0.0
    %222 = vmatpush1.msra.mxu0 %v184
    %223 = vmatprep.subr.mxu0 0.0
    %224 = vmatpush1.msra.mxu0 %v185
    %225 = vmatprep.subr.mxu0 0.0
    %226 = vmatpush1.msra.mxu0 0.0
    %227 = vmatprep.subr.mxu0 0.0
    %228 = vmatpush1.msra.mxu0 0.0
    %229 = vmatprep.subr.mxu0 0.0
    %230 = vmatpush1.msra.mxu0 0.0
    %231 = vmatprep.subr.mxu0 0.0
    %232 = vmatpush1.msra.mxu0 0.0
    %233 = vmatprep.subr.mxu0 0.0
    %234 = vmatpush1.msra.mxu0 0.0
    %235 = vmatprep.subr.mxu0 0.0
    %236 = vmatpush1.msra.mxu0 0.0
    %237 = vmatprep.subr.mxu0 0.0
    %238 = vmatpush1.msra.mxu0 0.0
    %239 = vmatprep.subr.mxu0 0.0
    %240 = vmatpush1.msra.mxu0 0.0
    %241 = vmatprep.subr.mxu0 0.0
    %242 = vmatpush1.msra.mxu0 0.0
    %243 = vmatprep.subr.mxu0 0.0
    %244 = vmatpush1.msra.mxu0 0.0
    %245 = vmatprep.subr.mxu0 0.0
    %246 = vmatpush1.msra.mxu0 0.0
    %247 = vmatprep.subr.mxu0 0.0
    %248 = vmatpush1.msra.mxu0 0.0
    %249 = vmatprep.subr.mxu0 0.0
    %250 = vmatpush1.msra.mxu0 0.0
    %251 = vmatprep.subr.mxu0 0.0
    %252 = vmatpush1.msra.mxu0 0.0
    %253 = vmatprep.subr.mxu0 0.0
    %254 = vmatpush1.msra.mxu0 0.0
    %255 = vmatprep.subr.mxu0 0.0
    %256 = vmatpush1.msra.mxu0 0.0
    %257 = vmatprep.mubr.f32.mxu0 0.0
    %258 = vmatmul.mubr.f32.gmra.mrb[0].mxu0 %v168
    %v259 = vpop.f32.mrb[0].mxu0
    %v260 = vadd.f32 %v191, %v259
    %v261 = vpop.f32.mrb[0].mxu0
    %262 = vmatprep.mubr.f32.mxu0 0.0
    %263 = vmatmul.mubr.f32.gmra.mrb[0].mxu0 %v169
    %v264 = vpop.f32.mrb[0].mxu0
    %v265 = vadd.f32 %v191, %v264
    %v266 = vpop.f32.mrb[0].mxu0
    %267 = vdwg.mxu0
    %268 = vadd.xlane.f32.xlu0 %v260
    %v269 = vpop.xlane.xlu0 %268
    %270 = vadd.xlane.f32.xlu0 %v265
    %v271 = vpop.xlane.xlu0 %270
    %v272 = vmul.f32 %v269, 0.03125
    %v273 = vmul.f32 %v271, 0.03125
    %v274 = vsub.f32 %v260, %v272
    %v275 = vsub.f32 %v265, %v273
    %v276 = vmul.f32 %v274, %v274
    %v277 = vmul.f32 %v275, %v275
    %278 = vadd.xlane.f32.xlu0 %v276
    %v279 = vpop.xlane.xlu0 %278
    %280 = vadd.xlane.f32.xlu0 %v277
    %v281 = vpop.xlane.xlu0 %280
    %v282 = vmul.f32 %v272, 96.0
    %v283 = vmul.f32 %v273, 96.0
    %v284 = vmul.f32 %v282, %v272
    %v285 = vmul.f32 %v283, %v273
    %v286 = vsub.f32 %v279, %v284
    %v287 = vsub.f32 %v281, %v285
    %v288 = vmul.f32 %v286, 0.03125
    %v289 = vmul.f32 %v287, 0.03125
    %v290 = vadd.f32 %v288, 1e-05
    %v291 = vadd.f32 %v289, 1e-05
    %v292 = vrsqrt.pop %v290
    %v293 = vrsqrt.pop %v291
    %v294 = vmul.f32 %v274, %v292
    %v295 = vmul.f32 %v275, %v293
    %v296 = vld [vmem:[%s5] sm:$0x1]
    %v298 = vlaneseq
    %v299 = vshrl.u32 %v298, 7
    %v300 = vsub.s32 0, %v299
    %v301 = vrot.slane %v296, %v300
    %v303 = vmul.f32 %v294, %v301
    %v304 = vmul.f32 %v295, %v301
    %v305 = vld [vmem:[%s6] sm:$0x1]
    %v307 = vlaneseq
    %v308 = vshrl.u32 %v307, 7
    %v309 = vsub.s32 0, %v308
    %v310 = vrot.slane %v305, %v309
    %v312 = vadd.f32 %v303, %v310
    %v313 = vadd.f32 %v304, %v310
    %v314 = vadd.f32 %v68, %v312
    %v315 = vadd.f32 %v69, %v313
    %316 = vst [vmem:[#allocation8] sm:$0xff] %v314
    %317 = vst [vmem:[#allocation8 + $0x8] sm:$0xff] %v315
    // Predicated region
    $region42: #{tpu_custom_call.1} parent=1 // pred_check
      _
    $region43: #{tpu_custom_call.1} parent=1 // pred_check_branch
      %319 = sbr.rel (0) target = $region45
    $region44: #{tpu_custom_call.1} parent=1 // pred_region
      %s321 = ssub.s32 256, 256
      %322 = vsyncadd [#allocation4], %s321
      %s323 = sshll.u32 [#allocation8], 4
      %s324 = int_to_ptr.vmem [resolvable:$true] %s323
      %329 = dma.vmem_to_hbm [thread:$0]  %s324, 256, %s7, [#allocation4], 128, 128, 8
    $region45: #{tpu_custom_call.1} parent=1 // pred_fallthru
      _
    // Predicated region
    $region46: #{tpu_custom_call.1} parent=1 // pred_check
      _
    $region47: #{tpu_custom_call.1} parent=1 // pred_check_branch
      %331 = sbr.rel (0) target = $region49
    $region48: #{tpu_custom_call.1} parent=1 // pred_region
      %332 = dma.done [#allocation4], 256
    $region49: #{tpu_custom_call.1} parent=1 // pred_fallthru
      _
    %333 = vsyncpa [#allocation3], 1
    %334 = vsyncpa [#allocation6], 1
    %335 = vsyncpa [#allocation4], 1

</llo_original>
